<compile_context>
chip_gen: v5e
topology: v5e:2x2
jax: 0.10.0
libtpu: 0.0.40
codegen_flags: <defaults>
</compile_context>

<pallas_src>
import functools

import jax
import jax.numpy as jnp
from jax.experimental import pallas as pl
from jax.experimental.pallas import tpu as pltpu

LANE = 128


def _hw_info():
    """(vmem_capacity_bytes, tensorcores_per_chip) with safe fallbacks."""
    vmem_cap = 64 << 20  # conservative default (v7x per-TC VMEM)
    try:
        vmem_cap = int(pltpu.get_tpu_info().vmem_capacity_bytes)
    except Exception:
        pass
    cores = 1
    try:
        kind = jax.devices()[0].device_kind.lower()
        if "v7" in kind:  # v7x: 2 TensorCores/chip; v5e/v6e: 1
            cores = 2
    except Exception:
        pass
    return vmem_cap, cores


def _wmse_kernel(p_ref, t_ref, w_ref, o_ref, acc_ref, *,
                 tile_rows, acc_rows, rows_total):
    c = pl.program_id(0)          # core shard       ("parallel")
    i = pl.program_id(1)          # reduction step   ("arbitrary")

    @pl.when(i == 0)
    def _init():
        acc_ref[...] = jnp.zeros_like(acc_ref)

    d = p_ref[...].astype(jnp.float32) - t_ref[...].astype(jnp.float32)
    val = w_ref[...].astype(jnp.float32) * d * d

    vblk = c * pl.num_programs(1) + i            # virtual row-block id
    start = vblk * tile_rows
    in_range = start + tile_rows <= rows_total   # whole tile holds real data?

    # Fast path: interior tiles — no masking work at all.
    @pl.when(in_range)
    def _fast():
        acc_ref[...] += val.reshape(-1, acc_rows, LANE).sum(axis=0)

    # Slow path: the single ragged last block and fully-virtual clamped blocks
    # of an over-provisioned core shard — zero rows past the real data.
    @pl.when(jnp.logical_not(in_range))
    def _edge():
        row = jax.lax.broadcasted_iota(jnp.int32, (tile_rows, LANE), 0)
        masked = jnp.where(start + row < rows_total, val, 0.0)
        acc_ref[...] += masked.reshape(-1, acc_rows, LANE).sum(axis=0)

    # Single XLU cross-lane/sublane reduction, once per core shard.
    @pl.when(i == pl.num_programs(1) - 1)
    def _finalize():
        o_ref[...] = jnp.sum(acc_ref[...]).reshape(1, 1, 1)


def weighted_mse_loss(y_pred, y_true, weight, *, tile_rows=8192):
    """Pallas TPU implementation of (weight * (y_pred - y_true)**2).mean()."""
    assert y_pred.shape == y_true.shape == weight.shape
    out_dtype = jnp.result_type(y_pred.dtype, y_true.dtype, weight.dtype)
    n = y_pred.size
    if n == 0:
        # Matches torch's .mean() on an empty tensor (NaN); avoids 0/0 below.
        return jnp.full((), jnp.nan, dtype=out_dtype)

    p_flat = y_pred.reshape(-1)
    t_flat = y_true.reshape(-1)
    w_flat = weight.reshape(-1)

    n_main = (n // LANE) * LANE

    # <128-element tail handled with plain jnp (no jnp.pad HBM copies).
    if n_main < n:
        dp = p_flat[n_main:].astype(jnp.float32) - t_flat[n_main:].astype(jnp.float32)
        tail_sum = jnp.sum(w_flat[n_main:].astype(jnp.float32) * dp * dp)
    else:
        tail_sum = jnp.zeros((), jnp.float32)

    if n_main == 0:
        return (tail_sum / jnp.float32(n)).astype(out_dtype)

    p = p_flat[:n_main].reshape(-1, LANE)
    t = t_flat[:n_main].reshape(-1, LANE)
    w = w_flat[:n_main].reshape(-1, LANE)
    rows = n_main // LANE

    itemsizes = [jnp.dtype(x.dtype).itemsize for x in (p, t, w)]
    # Native sublane packing: 8 rows for 32-bit, 16 for bf16, 32 for int8/fp8.
    pack = max(max(8, 32 // s) for s in itemsizes)

    vmem_cap, n_cores = _hw_info()

    # Cap the pipelined footprint (3 inputs x 2 buffers x block) well under VMEM.
    budget = min(48 << 20, vmem_cap // 2)
    bytes_per_row = 2 * LANE * sum(itemsizes)          # x2: double buffering
    max_tile = max(pack, (budget // bytes_per_row) // pack * pack)

    tile_rows = max(pack, (tile_rows // pack) * pack)
    tile_rows = min(tile_rows, max_tile)
    tile_rows = min(tile_rows, ((rows + pack - 1) // pack) * pack)

    # Partial-accumulator height: several independent add chains per step
    # instead of one long dependent chain; must divide tile_rows.
    acc_rows = 64
    while tile_rows % acc_rows:
        acc_rows //= 2

    n_row_blocks = pl.cdiv(rows, tile_rows)
    num_cores = max(1, min(n_cores, n_row_blocks))
    tiles_per_core = pl.cdiv(n_row_blocks, num_cores)

    # Clamp so the DMA never starts past the array; fully-virtual blocks are
    # masked to zero inside the kernel.
    def in_index(c, i):
        return (jnp.minimum(c * tiles_per_core + i, n_row_blocks - 1), 0)

    blk = pl.BlockSpec((tile_rows, LANE), in_index)

    block_bytes = tile_rows * LANE * sum(itemsizes)
    vmem_limit = int(min(max(2 * block_bytes + (4 << 20), 32 << 20),
                         max(vmem_cap - (2 << 20), 32 << 20)))

    kernel = functools.partial(_wmse_kernel, tile_rows=tile_rows,
                               acc_rows=acc_rows, rows_total=rows)

    partials = pl.pallas_call(
        kernel,
        out_shape=jax.ShapeDtypeStruct((num_cores, 1, 1), jnp.float32),
        grid_spec=pltpu.PrefetchScalarGridSpec(
            num_scalar_prefetch=0,
            grid=(num_cores, tiles_per_core),
            in_specs=[blk, blk, blk],
            out_specs=pl.BlockSpec((1, 1, 1), lambda c, i: (c, 0, 0)),
            scratch_shapes=[pltpu.VMEM((acc_rows, LANE), jnp.float32)],
        ),
        compiler_params=pltpu.CompilerParams(
            # TODO(synk): verify in xprof that the leading "parallel" axis
            # shards across both TensorCores on v7x; else use CORE_PARALLEL.
            dimension_semantics=("parallel", "arbitrary"),
            vmem_limit_bytes=vmem_limit,
        ),
    )(p, t, w)

    total = jnp.sum(partials) + tail_sum
    return (total / jnp.float32(n)).astype(out_dtype)


if __name__ == "__main__":
    key = jax.random.PRNGKey(0)
    k1, k2, k3 = jax.random.split(key, 3)

    # Small shapes consistent with a 3D-CNN regression target: (B, C, D, H, W).
    shape = (2, 4, 8, 16, 16)
    y_pred = jax.random.normal(k1, shape, dtype=jnp.float32)
    y_true = jax.random.normal(k2, shape, dtype=jnp.float32)
    weight = jax.random.uniform(k3, shape, dtype=jnp.float32)

    ref = jnp.mean(weight * (y_pred - y_true) ** 2)

    # 1) Default (single-block, fast-path) case.
    loss = jax.block_until_ready(weighted_mse_loss(y_pred, y_true, weight))
    assert jnp.allclose(loss, ref, rtol=1e-5, atol=1e-6), (loss, ref)

    # 2) Small tiles -> exercises multi-block accumulation / core split path.
    loss_mb = jax.block_until_ready(
        weighted_mse_loss(y_pred, y_true, weight, tile_rows=32))
    assert jnp.allclose(loss_mb, ref, rtol=1e-5, atol=1e-6), (loss_mb, ref)

    # 3) Ragged size (numel % 128 != 0) -> wrapper tail + in-kernel edge mask.
    shape2 = (3, 5, 7, 11)
    a = jax.random.normal(k1, shape2, dtype=jnp.float32)
    b = jax.random.normal(k2, shape2, dtype=jnp.float32)
    w2 = jax.random.uniform(k3, shape2, dtype=jnp.float32)
    loss2 = jax.block_until_ready(weighted_mse_loss(a, b, w2))
    ref2 = jnp.mean(w2 * (a - b) ** 2)
    assert jnp.allclose(loss2, ref2, rtol=1e-5, atol=1e-6), (loss2, ref2)

    print("KERNEL_OK")
</pallas_src>

<mosaic_0001>
module attributes {stable_mosaic.version = 11 : i64} {
  func.func @_wmse_kernel(%arg0: i32, %arg1: i32, %arg2: memref<128x128xf32, #tpu.memory_space<vmem>>, %arg3: memref<128x128xf32, #tpu.memory_space<vmem>>, %arg4: memref<128x128xf32, #tpu.memory_space<vmem>>, %arg5: memref<1x1x1xf32, #tpu.memory_space<vmem>>, %arg6: memref<64x128xf32, #tpu.memory_space<vmem>>) attributes {dimension_semantics = [#tpu.dimension_semantics<parallel>, #tpu.dimension_semantics<arbitrary>], iteration_bounds = array<i64: 1, 1>, scalar_prefetch = 0 : i64, scratch_operands = 1 : i64, tpu.core_type = #tpu.core_type<tc>, window_params = [{transform_indices = @transform_0, window_bounds = array<i64: 128, 128>}, {transform_indices = @transform_1, window_bounds = array<i64: 128, 128>}, {transform_indices = @transform_2, window_bounds = array<i64: 128, 128>}, {transform_indices = @transform_3, window_bounds = array<i64: 1, 1, 1>}]} {
    %c0_i32 = arith.constant 0 : i32
    %0 = arith.cmpi eq, %arg1, %c0_i32 : i32
    %1 = arith.extui %0 : i1 to i32
    %c0_i32_0 = arith.constant 0 : i32
    %2 = arith.cmpi ne, %1, %c0_i32_0 : i32
    scf.if %2 {
      %cst = arith.constant 0.000000e+00 : f32
      %22 = vector.broadcast %cst : f32 to vector<64x128xf32>
      %c0_12 = arith.constant 0 : index
      %c0_13 = arith.constant 0 : index
      %23 = vector.load %arg6[%c0_12, %c0_13] : memref<64x128xf32, #tpu.memory_space<vmem>>, vector<64x128xf32>
      tpu.vector_store %arg6[%c0_12, %c0_13], %22 {strides = array<i32>} : memref<64x128xf32, #tpu.memory_space<vmem>>, vector<64x128xf32>,
    } else {
    }
    %c0 = arith.constant 0 : index
    %c0_1 = arith.constant 0 : index
    %3 = vector.load %arg2[%c0, %c0_1] : memref<128x128xf32, #tpu.memory_space<vmem>>, vector<128x128xf32>
    %c0_2 = arith.constant 0 : index
    %c0_3 = arith.constant 0 : index
    %4 = vector.load %arg3[%c0_2, %c0_3] : memref<128x128xf32, #tpu.memory_space<vmem>>, vector<128x128xf32>
    %5 = arith.subf %3, %4 : vector<128x128xf32>
    %c0_4 = arith.constant 0 : index
    %c0_5 = arith.constant 0 : index
    %6 = vector.load %arg4[%c0_4, %c0_5] : memref<128x128xf32, #tpu.memory_space<vmem>>, vector<128x128xf32>
    %7 = arith.mulf %6, %5 : vector<128x128xf32>
    %8 = arith.mulf %7, %5 : vector<128x128xf32>
    %c1_i32 = arith.constant 1 : i32
    %9 = arith.muli %arg0, %c1_i32 : i32
    %10 = arith.addi %9, %arg1 : i32
    %c128_i32 = arith.constant 128 : i32
    %11 = arith.muli %10, %c128_i32 : i32
    %c128_i32_6 = arith.constant 128 : i32
    %12 = arith.addi %11, %c128_i32_6 : i32
    %c128_i32_7 = arith.constant 128 : i32
    %13 = arith.cmpi sle, %12, %c128_i32_7 : i32
    %14 = arith.extui %13 : i1 to i32
    %c0_i32_8 = arith.constant 0 : i32
    %15 = arith.cmpi ne, %14, %c0_i32_8 : i32
    scf.if %15 {
      %c0_12 = arith.constant 0 : index
      %c0_13 = arith.constant 0 : index
      %22 = vector.load %arg6[%c0_12, %c0_13] : memref<64x128xf32, #tpu.memory_space<vmem>>, vector<64x128xf32>
      %23 = vector.shape_cast %8 : vector<128x128xf32> to vector<2x64x128xf32>
      %cst = arith.constant dense<0.000000e+00> : vector<64x128xf32>
      %24 = vector.multi_reduction <add>, %23, %cst [0] : vector<2x64x128xf32> to vector<64x128xf32>
      %25 = arith.addf %22, %24 : vector<64x128xf32>
      %c0_14 = arith.constant 0 : index
      %c0_15 = arith.constant 0 : index
      %26 = vector.load %arg6[%c0_14, %c0_15] : memref<64x128xf32, #tpu.memory_space<vmem>>, vector<64x128xf32>
      tpu.vector_store %arg6[%c0_14, %c0_15], %25 {strides = array<i32>} : memref<64x128xf32, #tpu.memory_space<vmem>>, vector<64x128xf32>,
    } else {
    }
    %true = arith.constant true
    %16 = arith.xori %13, %true : i1
    %17 = arith.extui %16 : i1 to i32
    %c0_i32_9 = arith.constant 0 : i32
    %18 = arith.cmpi ne, %17, %c0_i32_9 : i32
    scf.if %18 {
      %22 = tpu.iota {dimensions = array<i32: 0>} : vector<128x128xi32>
      %23 = vector.broadcast %11 : i32 to vector<128x128xi32>
      %24 = arith.addi %23, %22 : vector<128x128xi32>
      %c128_i32_12 = arith.constant 128 : i32
      %25 = vector.broadcast %c128_i32_12 : i32 to vector<128x128xi32>
      %26 = arith.cmpi slt, %24, %25 : vector<128x128xi32>
      %cst = arith.constant 0.000000e+00 : f32
      %27 = vector.broadcast %cst : f32 to vector<128x128xf32>
      %28 = arith.select %26, %8, %27 : vector<128x128xi1>, vector<128x128xf32>
      %c0_13 = arith.constant 0 : index
      %c0_14 = arith.constant 0 : index
      %29 = vector.load %arg6[%c0_13, %c0_14] : memref<64x128xf32, #tpu.memory_space<vmem>>, vector<64x128xf32>
      %30 = vector.shape_cast %28 : vector<128x128xf32> to vector<2x64x128xf32>
      %cst_15 = arith.constant dense<0.000000e+00> : vector<64x128xf32>
      %31 = vector.multi_reduction <add>, %30, %cst_15 [0] : vector<2x64x128xf32> to vector<64x128xf32>
      %32 = arith.addf %29, %31 : vector<64x128xf32>
      %c0_16 = arith.constant 0 : index
      %c0_17 = arith.constant 0 : index
      %33 = vector.load %arg6[%c0_16, %c0_17] : memref<64x128xf32, #tpu.memory_space<vmem>>, vector<64x128xf32>
      tpu.vector_store %arg6[%c0_16, %c0_17], %32 {strides = array<i32>} : memref<64x128xf32, #tpu.memory_space<vmem>>, vector<64x128xf32>,
    } else {
    }
    %c0_i32_10 = arith.constant 0 : i32
    %19 = arith.cmpi eq, %arg1, %c0_i32_10 : i32
    %20 = arith.extui %19 : i1 to i32
    %c0_i32_11 = arith.constant 0 : i32
    %21 = arith.cmpi ne, %20, %c0_i32_11 : i32
    scf.if %21 {
      %c0_12 = arith.constant 0 : index
      %c0_13 = arith.constant 0 : index
      %22 = vector.load %arg6[%c0_12, %c0_13] : memref<64x128xf32, #tpu.memory_space<vmem>>, vector<64x128xf32>
      %23 = vector.shape_cast %22 : vector<64x128xf32> to vector<1x64x128xf32>
      %cst = arith.constant dense<0.000000e+00> : vector<1xf32>
      %24 = vector.multi_reduction <add>, %23, %cst [1, 2] : vector<1x64x128xf32> to vector<1xf32>
      %25 = vector.shape_cast %24 : vector<1xf32> to vector<1x1x1xf32>
      %26 = vector.extract %25[0, 0, 0] : f32 from vector<1x1x1xf32>
      %27 = vector.broadcast %26 : f32 to vector<1x1x1xf32>
      %c0_14 = arith.constant 0 : index
      %c0_15 = arith.constant 0 : index
      %c0_16 = arith.constant 0 : index
      %28 = vector.load %arg5[%c0_14, %c0_15, %c0_16] : memref<1x1x1xf32, #tpu.memory_space<vmem>>, vector<1x1x1xf32>
      tpu.vector_store %arg5[%c0_14, %c0_15, %c0_16], %27 {strides = array<i32>} : memref<1x1x1xf32, #tpu.memory_space<vmem>>, vector<1x1x1xf32>,
    } else {
    }
    return
  }
  func.func @transform_0(%arg0: i32, %arg1: i32) -> (i32, i32) {
    %c1_i32 = arith.constant 1 : i32
    %0 = arith.muli %arg0, %c1_i32 : i32
    %1 = arith.addi %0, %arg1 : i32
    %c0_i32 = arith.constant 0 : i32
    %2 = arith.minsi %1, %c0_i32 : i32
    %c0_i32_0 = arith.constant 0 : i32
    %c0_i32_1 = arith.constant 0 : i32
    return %2, %c0_i32_0 : i32, i32
  }
  func.func @transform_1(%arg0: i32, %arg1: i32) -> (i32, i32) {
    %c1_i32 = arith.constant 1 : i32
    %0 = arith.muli %arg0, %c1_i32 : i32
    %1 = arith.addi %0, %arg1 : i32
    %c0_i32 = arith.constant 0 : i32
    %2 = arith.minsi %1, %c0_i32 : i32
    %c0_i32_0 = arith.constant 0 : i32
    %c0_i32_1 = arith.constant 0 : i32
    return %2, %c0_i32_0 : i32, i32
  }
  func.func @transform_2(%arg0: i32, %arg1: i32) -> (i32, i32) {
    %c1_i32 = arith.constant 1 : i32
    %0 = arith.muli %arg0, %c1_i32 : i32
    %1 = arith.addi %0, %arg1 : i32
    %c0_i32 = arith.constant 0 : i32
    %2 = arith.minsi %1, %c0_i32 : i32
    %c0_i32_0 = arith.constant 0 : i32
    %c0_i32_1 = arith.constant 0 : i32
    return %2, %c0_i32_0 : i32, i32
  }
  func.func @transform_3(%arg0: i32, %arg1: i32) -> (i32, i32, i32) {
    %c0_i32 = arith.constant 0 : i32
    %c0_i32_0 = arith.constant 0 : i32
    %c0_i32_1 = arith.constant 0 : i32
    return %arg0, %c0_i32, %c0_i32_0 : i32, i32, i32
  }
}

</mosaic_0001>

<llo_original>
// kernel: tpu_custom_call.1
$region0: #{tpu_custom_call.1}
  #allocation0 [shape = 'u32[]', space=smem, size = 0x4, offset = 0x4, fixed_abs, tag = 'smem constant byte address 0x4 - core index']
  #allocation1 [shape = 'u32[72,128]{1,0:T(1,128)}', space=vmem, size = 0x9000, scoped, tag = 'internal scratch']
  #allocation2 [shape = 'f32[64,128]{1,0:T(8,128)}', space=vmem, size = 0x8000, scoped, tag = 'scratch operand']
  %s0 = inlined_call_operand.hbm [shape: f32[128,128], index: 0, kind: input, shape index: {}]
  %s1 = inlined_call_operand.hbm [shape: f32[128,128], index: 1, kind: input, shape index: {}]
  %s2 = inlined_call_operand.hbm [shape: f32[128,128], index: 2, kind: input, shape index: {}]
  %s3 = inlined_call_operand.hbm [shape: f32[1,1,1], index: 3, kind: output, shape index: {}]
  %s4 = sld [smem:[#allocation0]]
  $region50: #{tpu_custom_call.1} parent=0
    _
  %s6 = ssub.s32 1, %s4
  %s7 = scalar_select 0, %s6, %s4
  $region1: #{tpu_custom_call.1} parent=0
    #allocation3 [shape = 'u8[65536]{0}', space=vmem, size = 0x10000, scoped, tag = 'input window, operand 0, single buffered']
    #allocation4 [shape = 's32[1]{0}', space=sflag, size = 0x4, scoped, tag = 'scoped memory for tpu_custom_call.1']
    #allocation5 [shape = 's32[1]{0}', space=sflag, size = 0x4, scoped, tag = 'scoped memory for tpu_custom_call.1']
    #allocation6 [shape = 'u8[65536]{0}', space=vmem, size = 0x10000, scoped, tag = 'input window, operand 1, single buffered']
    #allocation7 [shape = 's32[1]{0}', space=sflag, size = 0x4, scoped, tag = 'scoped memory for tpu_custom_call.1']
    #allocation8 [shape = 'u8[65536]{0}', space=vmem, size = 0x10000, scoped, tag = 'input window, operand 2, single buffered']
    #allocation9 [shape = 'u8[512]{0}', space=vmem, size = 0x400, scoped, tag = 'output window, operand 0, single buffered']
    %8 = vsyncpa [#allocation4], 0
    %9 = vsyncpa [#allocation7], 0
    %10 = vsyncpa [#allocation5], 0
    // Predicated region
    $region2: #{tpu_custom_call.1} parent=1 // pred_check
      _
    $region3: #{tpu_custom_call.1} parent=1 // pred_check_branch
      %12 = sbr.rel (0) target = $region5
    $region4: #{tpu_custom_call.1} parent=1 // pred_region
      %s13 = sadd.s32 0, 0
      %p14 = scmp.lt.s32.totalorder %s13, 0
      %s15 = scalar_select %p14, %s13, 0
      %s16 = smul.u32 16, %s15
      %18 = vsyncadd [#allocation4], 0
      %s19 = smul.addr %s16, 8
      %s20 = scalar_lea.hbm %s0, %s19
      %s21 = sshll.u32 %s20, 4
      %s22 = int_to_ptr.hbm [resolvable:$true] %s21
      %s23 = sshll.u32 [#allocation3], 4
      %s24 = int_to_ptr.vmem [resolvable:$true] %s23
      %29 = dma.hbm_to_vmem [thread:$0]  %s22, 2048, %s24, [#allocation4], 128, 128, 8
    $region5: #{tpu_custom_call.1} parent=1 // pred_fallthru
      _
    // Predicated region
    $region6: #{tpu_custom_call.1} parent=1 // pred_check
      _
    $region7: #{tpu_custom_call.1} parent=1 // pred_check_branch
      %31 = sbr.rel (0) target = $region9
    $region8: #{tpu_custom_call.1} parent=1 // pred_region
      %s32 = sadd.s32 0, 0
      %p33 = scmp.lt.s32.totalorder %s32, 0
      %s34 = scalar_select %p33, %s32, 0
      %s35 = smul.u32 16, %s34
      %37 = vsyncadd [#allocation7], 0
      %s38 = smul.addr %s35, 8
      %s39 = scalar_lea.hbm %s1, %s38
      %s40 = sshll.u32 %s39, 4
      %s41 = int_to_ptr.hbm [resolvable:$true] %s40
      %s42 = sshll.u32 [#allocation6], 4
      %s43 = int_to_ptr.vmem [resolvable:$true] %s42
      %48 = dma.hbm_to_vmem [thread:$0]  %s41, 2048, %s43, [#allocation7], 128, 128, 8
    $region9: #{tpu_custom_call.1} parent=1 // pred_fallthru
      _
    // Predicated region
    $region10: #{tpu_custom_call.1} parent=1 // pred_check
      _
    $region11: #{tpu_custom_call.1} parent=1 // pred_check_branch
      %50 = sbr.rel (0) target = $region13
    $region12: #{tpu_custom_call.1} parent=1 // pred_region
      %s51 = sadd.s32 0, 0
      %p52 = scmp.lt.s32.totalorder %s51, 0
      %s53 = scalar_select %p52, %s51, 0
      %s54 = smul.u32 16, %s53
      %56 = vsyncadd [#allocation7], 0
      %s57 = smul.addr %s54, 8
      %s58 = scalar_lea.hbm %s2, %s57
      %s59 = sshll.u32 %s58, 4
      %s60 = int_to_ptr.hbm [resolvable:$true] %s59
      %s61 = sshll.u32 [#allocation8], 4
      %s62 = int_to_ptr.vmem [resolvable:$true] %s61
      %67 = dma.hbm_to_vmem [thread:$0]  %s60, 2048, %s62, [#allocation7], 128, 128, 8
    $region13: #{tpu_custom_call.1} parent=1 // pred_fallthru
      _
    // Predicated region
    $region14: #{tpu_custom_call.1} parent=1 // pred_check
      _
    $region15: #{tpu_custom_call.1} parent=1 // pred_check_branch
      %69 = sbr.rel (0) target = $region17
    $region16: #{tpu_custom_call.1} parent=1 // pred_region
      %71 = dma.done [#allocation4], 2048
    $region17: #{tpu_custom_call.1} parent=1 // pred_fallthru
      _
    // Predicated region
    $region18: #{tpu_custom_call.1} parent=1 // pred_check
      _
    $region19: #{tpu_custom_call.1} parent=1 // pred_check_branch
      %73 = sbr.rel (0) target = $region21
    $region20: #{tpu_custom_call.1} parent=1 // pred_region
      %75 = dma.done [#allocation7], 2048
    $region21: #{tpu_custom_call.1} parent=1 // pred_fallthru
      _
    // Predicated region
    $region22: #{tpu_custom_call.1} parent=1 // pred_check
      _
    $region23: #{tpu_custom_call.1} parent=1 // pred_check_branch
      %77 = sbr.rel (0) target = $region25
    $region24: #{tpu_custom_call.1} parent=1 // pred_region
      %79 = dma.done [#allocation7], 2048
    $region25: #{tpu_custom_call.1} parent=1 // pred_fallthru
      _
    %s80 = sadd.s32 0, 0
    %p81 = scmp.lt.s32.totalorder %s80, 0
    %s82 = scalar_select %p81, %s80, 0
    %s83 = smul.u32 16, %s82
    %s84 = sadd.s32 0, 0
    %p85 = scmp.lt.s32.totalorder %s84, 0
    %s86 = scalar_select %p85, %s84, 0
    %s87 = smul.u32 16, %s86
    %s88 = sadd.s32 0, 0
    %p89 = scmp.lt.s32.totalorder %s88, 0
    %s90 = scalar_select %p89, %s88, 0
    %s91 = smul.u32 16, %s90
    %p92 = scmp.eq.s32.totalorder 0, 0
    // Predicated region
    $region26: #{tpu_custom_call.1} parent=1 // pred_check
      %p93 = pneg %p92
    $region27: #{tpu_custom_call.1} parent=1 // pred_check_branch
      %95 = sbr.rel (%p93) target = $region29
    $region28: #{tpu_custom_call.1} parent=1 // pred_region
      %96 = vst [vmem:[#allocation2] sm:$0xff] 0.0
      %97 = vst [vmem:[#allocation2 + $0x8] sm:$0xff] 0.0
      %98 = vst [vmem:[#allocation2 + $0x10] sm:$0xff] 0.0
      %99 = vst [vmem:[#allocation2 + $0x18] sm:$0xff] 0.0
      %100 = vst [vmem:[#allocation2 + $0x20] sm:$0xff] 0.0
      %101 = vst [vmem:[#allocation2 + $0x28] sm:$0xff] 0.0
      %102 = vst [vmem:[#allocation2 + $0x30] sm:$0xff] 0.0
      %103 = vst [vmem:[#allocation2 + $0x38] sm:$0xff] 0.0
    $region29: #{tpu_custom_call.1} parent=1 // pred_fallthru
      _
    %v104 = vld [vmem:[#allocation3] sm:$0xff]
    %v105 = vld [vmem:[#allocation3 + $0x8] sm:$0xff]
    %v106 = vld [vmem:[#allocation3 + $0x10] sm:$0xff]
    %v107 = vld [vmem:[#allocation3 + $0x18] sm:$0xff]
    %v108 = vld [vmem:[#allocation3 + $0x20] sm:$0xff]
    %v109 = vld [vmem:[#allocation3 + $0x28] sm:$0xff]
    %v110 = vld [vmem:[#allocation3 + $0x30] sm:$0xff]
    %v111 = vld [vmem:[#allocation3 + $0x38] sm:$0xff]
    %v112 = vld [vmem:[#allocation3 + $0x40] sm:$0xff]
    %v113 = vld [vmem:[#allocation3 + $0x48] sm:$0xff]
    %v114 = vld [vmem:[#allocation3 + $0x50] sm:$0xff]
    %v115 = vld [vmem:[#allocation3 + $0x58] sm:$0xff]
    %v116 = vld [vmem:[#allocation3 + $0x60] sm:$0xff]
    %v117 = vld [vmem:[#allocation3 + $0x68] sm:$0xff]
    %v118 = vld [vmem:[#allocation3 + $0x70] sm:$0xff]
    %v119 = vld [vmem:[#allocation3 + $0x78] sm:$0xff]
    %v120 = vld [vmem:[#allocation6] sm:$0xff]
    %v121 = vld [vmem:[#allocation6 + $0x8] sm:$0xff]
    %v122 = vld [vmem:[#allocation6 + $0x10] sm:$0xff]
    %v123 = vld [vmem:[#allocation6 + $0x18] sm:$0xff]
    %v124 = vld [vmem:[#allocation6 + $0x20] sm:$0xff]
    %v125 = vld [vmem:[#allocation6 + $0x28] sm:$0xff]
    %v126 = vld [vmem:[#allocation6 + $0x30] sm:$0xff]
    %v127 = vld [vmem:[#allocation6 + $0x38] sm:$0xff]
    %v128 = vld [vmem:[#allocation6 + $0x40] sm:$0xff]
    %v129 = vld [vmem:[#allocation6 + $0x48] sm:$0xff]
    %v130 = vld [vmem:[#allocation6 + $0x50] sm:$0xff]
    %v131 = vld [vmem:[#allocation6 + $0x58] sm:$0xff]
    %v132 = vld [vmem:[#allocation6 + $0x60] sm:$0xff]
    %v133 = vld [vmem:[#allocation6 + $0x68] sm:$0xff]
    %v134 = vld [vmem:[#allocation6 + $0x70] sm:$0xff]
    %v135 = vld [vmem:[#allocation6 + $0x78] sm:$0xff]
    %v136 = vsub.f32 %v104, %v120
    %v137 = vsub.f32 %v105, %v121
    %v138 = vsub.f32 %v106, %v122
    %v139 = vsub.f32 %v107, %v123
    %v140 = vsub.f32 %v108, %v124
    %v141 = vsub.f32 %v109, %v125
    %v142 = vsub.f32 %v110, %v126
    %v143 = vsub.f32 %v111, %v127
    %v144 = vsub.f32 %v112, %v128
    %v145 = vsub.f32 %v113, %v129
    %v146 = vsub.f32 %v114, %v130
    %v147 = vsub.f32 %v115, %v131
    %v148 = vsub.f32 %v116, %v132
    %v149 = vsub.f32 %v117, %v133
    %v150 = vsub.f32 %v118, %v134
    %v151 = vsub.f32 %v119, %v135
    %v152 = vld [vmem:[#allocation8] sm:$0xff]
    %v153 = vld [vmem:[#allocation8 + $0x8] sm:$0xff]
    %v154 = vld [vmem:[#allocation8 + $0x10] sm:$0xff]
    %v155 = vld [vmem:[#allocation8 + $0x18] sm:$0xff]
    %v156 = vld [vmem:[#allocation8 + $0x20] sm:$0xff]
    %v157 = vld [vmem:[#allocation8 + $0x28] sm:$0xff]
    %v158 = vld [vmem:[#allocation8 + $0x30] sm:$0xff]
    %v159 = vld [vmem:[#allocation8 + $0x38] sm:$0xff]
    %v160 = vld [vmem:[#allocation8 + $0x40] sm:$0xff]
    %v161 = vld [vmem:[#allocation8 + $0x48] sm:$0xff]
    %v162 = vld [vmem:[#allocation8 + $0x50] sm:$0xff]
    %v163 = vld [vmem:[#allocation8 + $0x58] sm:$0xff]
    %v164 = vld [vmem:[#allocation8 + $0x60] sm:$0xff]
    %v165 = vld [vmem:[#allocation8 + $0x68] sm:$0xff]
    %v166 = vld [vmem:[#allocation8 + $0x70] sm:$0xff]
    %v167 = vld [vmem:[#allocation8 + $0x78] sm:$0xff]
    %v168 = vmul.f32 %v152, %v136
    %v169 = vmul.f32 %v153, %v137
    %v170 = vmul.f32 %v154, %v138
    %v171 = vmul.f32 %v155, %v139
    %v172 = vmul.f32 %v156, %v140
    %v173 = vmul.f32 %v157, %v141
    %v174 = vmul.f32 %v158, %v142
    %v175 = vmul.f32 %v159, %v143
    %v176 = vmul.f32 %v160, %v144
    %v177 = vmul.f32 %v161, %v145
    %v178 = vmul.f32 %v162, %v146
    %v179 = vmul.f32 %v163, %v147
    %v180 = vmul.f32 %v164, %v148
    %v181 = vmul.f32 %v165, %v149
    %v182 = vmul.f32 %v166, %v150
    %v183 = vmul.f32 %v167, %v151
    %v184 = vmul.f32 %v168, %v136
    %v185 = vmul.f32 %v169, %v137
    %v186 = vmul.f32 %v170, %v138
    %v187 = vmul.f32 %v171, %v139
    %v188 = vmul.f32 %v172, %v140
    %v189 = vmul.f32 %v173, %v141
    %v190 = vmul.f32 %v174, %v142
    %v191 = vmul.f32 %v175, %v143
    %v192 = vmul.f32 %v176, %v144
    %v193 = vmul.f32 %v177, %v145
    %v194 = vmul.f32 %v178, %v146
    %v195 = vmul.f32 %v179, %v147
    %v196 = vmul.f32 %v180, %v148
    %v197 = vmul.f32 %v181, %v149
    %v198 = vmul.f32 %v182, %v150
    %v199 = vmul.f32 %v183, %v151
    %s200 = sadd.s32 0, 0
    %s201 = smul.u32 %s200, 128
    %s202 = sadd.s32 %s201, 128
    %p203 = scmp.le.s32.totalorder %s202, 128
    // Predicated region
    $region30: #{tpu_custom_call.1} parent=1 // pred_check
      %p204 = pneg %p203
    $region31: #{tpu_custom_call.1} parent=1 // pred_check_branch
      %206 = sbr.rel (%p204) target = $region33
    $region32: #{tpu_custom_call.1} parent=1 // pred_region
      %v207 = vld [vmem:[#allocation2] sm:$0xff]
      %v208 = vld [vmem:[#allocation2 + $0x8] sm:$0xff]
      %v209 = vld [vmem:[#allocation2 + $0x10] sm:$0xff]
      %v210 = vld [vmem:[#allocation2 + $0x18] sm:$0xff]
      %v211 = vld [vmem:[#allocation2 + $0x20] sm:$0xff]
      %v212 = vld [vmem:[#allocation2 + $0x28] sm:$0xff]
      %v213 = vld [vmem:[#allocation2 + $0x30] sm:$0xff]
      %v214 = vld [vmem:[#allocation2 + $0x38] sm:$0xff]
      %v215 = vadd.f32 %v184, %v192
      %v216 = vadd.f32 %v185, %v193
      %v217 = vadd.f32 %v186, %v194
      %v218 = vadd.f32 %v187, %v195
      %v219 = vadd.f32 %v188, %v196
      %v220 = vadd.f32 %v189, %v197
      %v221 = vadd.f32 %v190, %v198
      %v222 = vadd.f32 %v191, %v199
      %v223 = vadd.f32 %v207, %v215
      %v224 = vadd.f32 %v208, %v216
      %v225 = vadd.f32 %v209, %v217
      %v226 = vadd.f32 %v210, %v218
      %v227 = vadd.f32 %v211, %v219
      %v228 = vadd.f32 %v212, %v220
      %v229 = vadd.f32 %v213, %v221
      %v230 = vadd.f32 %v214, %v222
      %231 = vst [vmem:[#allocation2] sm:$0xff] %v223
      %232 = vst [vmem:[#allocation2 + $0x8] sm:$0xff] %v224
      %233 = vst [vmem:[#allocation2 + $0x10] sm:$0xff] %v225
      %234 = vst [vmem:[#allocation2 + $0x18] sm:$0xff] %v226
      %235 = vst [vmem:[#allocation2 + $0x20] sm:$0xff] %v227
      %236 = vst [vmem:[#allocation2 + $0x28] sm:$0xff] %v228
      %237 = vst [vmem:[#allocation2 + $0x30] sm:$0xff] %v229
      %238 = vst [vmem:[#allocation2 + $0x38] sm:$0xff] %v230
    $region33: #{tpu_custom_call.1} parent=1 // pred_fallthru
      _
    %p239 = scmp.gt.s32.totalorder %s202, 128
    // Predicated region
    $region34: #{tpu_custom_call.1} parent=1 // pred_check
      %p240 = pneg %p239
    $region35: #{tpu_custom_call.1} parent=1 // pred_check_branch
      %242 = sbr.rel (%p240) target = $region37
    $region36: #{tpu_custom_call.1} parent=1 // pred_region
      %v243 = vlaneseq
      %v244 = vshrl.u32 %v243, 7
      %v245 = vadd.s32 %v244, 8
      %v246 = vadd.s32 %v244, 16
      %v247 = vadd.s32 %v244, 24
      %v248 = vadd.s32 %v244, 32
      %v249 = vadd.s32 %v244, 40
      %v250 = vadd.s32 %v244, 48
      %v251 = vadd.s32 %v244, 56
      %v252 = vadd.s32 %v244, 64
      %v253 = vadd.s32 %v244, 72
      %v254 = vadd.s32 %v244, 80
      %v255 = vadd.s32 %v244, 88
      %v256 = vadd.s32 %v244, 96
      %v257 = vadd.s32 %v244, 104
      %v258 = vadd.s32 %v244, 112
      %v259 = vadd.s32 %v244, 120
      %v260 = vstv %s201
      %v261 = vadd.s32 %v260, %v244
      %v262 = vadd.s32 %v260, %v245
      %v263 = vadd.s32 %v260, %v246
      %v264 = vadd.s32 %v260, %v247
      %v265 = vadd.s32 %v260, %v248
      %v266 = vadd.s32 %v260, %v249
      %v267 = vadd.s32 %v260, %v250
      %v268 = vadd.s32 %v260, %v251
      %v269 = vadd.s32 %v260, %v252
      %v270 = vadd.s32 %v260, %v253
      %v271 = vadd.s32 %v260, %v254
      %v272 = vadd.s32 %v260, %v255
      %v273 = vadd.s32 %v260, %v256
      %v274 = vadd.s32 %v260, %v257
      %v275 = vadd.s32 %v260, %v258
      %v276 = vadd.s32 %v260, %v259
      %vm277 = vcmp.lt.s32.totalorder %v261, 128
      %vm278 = vcmp.lt.s32.totalorder %v262, 128
      %vm279 = vcmp.lt.s32.totalorder %v263, 128
      %vm280 = vcmp.lt.s32.totalorder %v264, 128
      %vm281 = vcmp.lt.s32.totalorder %v265, 128
      %vm282 = vcmp.lt.s32.totalorder %v266, 128
      %vm283 = vcmp.lt.s32.totalorder %v267, 128
      %vm284 = vcmp.lt.s32.totalorder %v268, 128
      %vm285 = vcmp.lt.s32.totalorder %v269, 128
      %vm286 = vcmp.lt.s32.totalorder %v270, 128
      %vm287 = vcmp.lt.s32.totalorder %v271, 128
      %vm288 = vcmp.lt.s32.totalorder %v272, 128
      %vm289 = vcmp.lt.s32.totalorder %v273, 128
      %vm290 = vcmp.lt.s32.totalorder %v274, 128
      %vm291 = vcmp.lt.s32.totalorder %v275, 128
      %vm292 = vcmp.lt.s32.totalorder %v276, 128
      %v293 = vsel %vm277, %v184, 0.0
      %v294 = vsel %vm278, %v185, 0.0
      %v295 = vsel %vm279, %v186, 0.0
      %v296 = vsel %vm280, %v187, 0.0
      %v297 = vsel %vm281, %v188, 0.0
      %v298 = vsel %vm282, %v189, 0.0
      %v299 = vsel %vm283, %v190, 0.0
      %v300 = vsel %vm284, %v191, 0.0
      %v301 = vsel %vm285, %v192, 0.0
      %v302 = vsel %vm286, %v193, 0.0
      %v303 = vsel %vm287, %v194, 0.0
      %v304 = vsel %vm288, %v195, 0.0
      %v305 = vsel %vm289, %v196, 0.0
      %v306 = vsel %vm290, %v197, 0.0
      %v307 = vsel %vm291, %v198, 0.0
      %v308 = vsel %vm292, %v199, 0.0
      %v309 = vld [vmem:[#allocation2] sm:$0xff]
      %v310 = vld [vmem:[#allocation2 + $0x8] sm:$0xff]
      %v311 = vld [vmem:[#allocation2 + $0x10] sm:$0xff]
      %v312 = vld [vmem:[#allocation2 + $0x18] sm:$0xff]
      %v313 = vld [vmem:[#allocation2 + $0x20] sm:$0xff]
      %v314 = vld [vmem:[#allocation2 + $0x28] sm:$0xff]
      %v315 = vld [vmem:[#allocation2 + $0x30] sm:$0xff]
      %v316 = vld [vmem:[#allocation2 + $0x38] sm:$0xff]
      %v317 = vadd.f32 %v293, %v301
      %v318 = vadd.f32 %v294, %v302
      %v319 = vadd.f32 %v295, %v303
      %v320 = vadd.f32 %v296, %v304
      %v321 = vadd.f32 %v297, %v305
      %v322 = vadd.f32 %v298, %v306
      %v323 = vadd.f32 %v299, %v307
      %v324 = vadd.f32 %v300, %v308
      %v325 = vadd.f32 %v309, %v317
      %v326 = vadd.f32 %v310, %v318
      %v327 = vadd.f32 %v311, %v319
      %v328 = vadd.f32 %v312, %v320
      %v329 = vadd.f32 %v313, %v321
      %v330 = vadd.f32 %v314, %v322
      %v331 = vadd.f32 %v315, %v323
      %v332 = vadd.f32 %v316, %v324
      %333 = vst [vmem:[#allocation2] sm:$0xff] %v325
      %334 = vst [vmem:[#allocation2 + $0x8] sm:$0xff] %v326
      %335 = vst [vmem:[#allocation2 + $0x10] sm:$0xff] %v327
      %336 = vst [vmem:[#allocation2 + $0x18] sm:$0xff] %v328
      %337 = vst [vmem:[#allocation2 + $0x20] sm:$0xff] %v329
      %338 = vst [vmem:[#allocation2 + $0x28] sm:$0xff] %v330
      %339 = vst [vmem:[#allocation2 + $0x30] sm:$0xff] %v331
      %340 = vst [vmem:[#allocation2 + $0x38] sm:$0xff] %v332
    $region37: #{tpu_custom_call.1} parent=1 // pred_fallthru
      _
    // Predicated region
    $region38: #{tpu_custom_call.1} parent=1 // pred_check
      %p341 = pneg %p92
    $region39: #{tpu_custom_call.1} parent=1 // pred_check_branch
      %343 = sbr.rel (%p341) target = $region41
    $region40: #{tpu_custom_call.1} parent=1 // pred_region
      %v344 = vld [vmem:[#allocation2] sm:$0xff]
      %v345 = vld [vmem:[#allocation2 + $0x8] sm:$0xff]
      %v346 = vld [vmem:[#allocation2 + $0x10] sm:$0xff]
      %v347 = vld [vmem:[#allocation2 + $0x18] sm:$0xff]
      %v348 = vld [vmem:[#allocation2 + $0x20] sm:$0xff]
      %v349 = vld [vmem:[#allocation2 + $0x28] sm:$0xff]
      %v350 = vld [vmem:[#allocation2 + $0x30] sm:$0xff]
      %v351 = vld [vmem:[#allocation2 + $0x38] sm:$0xff]
      %v352 = vadd.f32 %v344, %v345
      %v353 = vadd.f32 %v352, %v346
      %v354 = vadd.f32 %v353, %v347
      %v355 = vadd.f32 %v354, %v348
      %v356 = vadd.f32 %v355, %v349
      %v357 = vadd.f32 %v356, %v350
      %v358 = vadd.f32 %v357, %v351
      %359 = vadd.xlane.f32.xlu0 %v358
      %v360 = vpop.xlane.xlu0 %359
      %v361 = vrot.slane %v360, 4
      %v362 = vadd.f32 %v360, %v361
      %v363 = vrot.slane %v362, 2
      %v364 = vadd.f32 %v362, %v363
      %v365 = vrot.slane %v364, 1
      %v366 = vadd.f32 %v364, %v365
      %s367 = vtos %v366
      %v368 = vstv %s367
      %vm369 = vcmask 0
      %370 = vst.msk [vmem:[#allocation9] sm:$0x1] %vm369, %v368
    $region41: #{tpu_custom_call.1} parent=1 // pred_fallthru
      _
    // Predicated region
    $region42: #{tpu_custom_call.1} parent=1 // pred_check
      _
    $region43: #{tpu_custom_call.1} parent=1 // pred_check_branch
      %372 = sbr.rel (0) target = $region45
    $region44: #{tpu_custom_call.1} parent=1 // pred_region
      %374 = vsyncadd [#allocation5], 0
      %s376 = sshll.u32 [#allocation9], 4
      %s377 = int_to_ptr.vmem [resolvable:$true] %s376
      %s378 = sshll.u32 %s3, 4
      %s379 = int_to_ptr.hbm [resolvable:$true] %s378
      %381 = dma.vmem_to_hbm [thread:$0]  %s377, 16, %s379, [#allocation5]
    $region45: #{tpu_custom_call.1} parent=1 // pred_fallthru
      _
    // Predicated region
    $region46: #{tpu_custom_call.1} parent=1 // pred_check
      _
    $region47: #{tpu_custom_call.1} parent=1 // pred_check_branch
      %383 = sbr.rel (0) target = $region49
    $region48: #{tpu_custom_call.1} parent=1 // pred_region
      %385 = dma.done [#allocation5], 16
    $region49: #{tpu_custom_call.1} parent=1 // pred_fallthru
      _
    %386 = vsyncpa [#allocation4], 1
    %387 = vsyncpa [#allocation7], 1
    %388 = vsyncpa [#allocation5], 1

</llo_original>
